<compile_context>
chip_gen: v5e
topology: v5e:2x2
jax: 0.10.0
libtpu: 0.0.40
codegen_flags: <defaults>
</compile_context>

<pallas_src>
import functools

import jax
import jax.numpy as jnp
from jax.experimental import pallas as pl
from jax.experimental.pallas import tpu as pltpu


def _alt_attention_kernel(xkv_ref, wqkv_ref, wproj_ref, bproj_ref, o_ref,
                          kcache_ref, vcache_ref, ctx_ref, acc_ref,
                          *, head_dim, heads_per_step, tq):
    # Grid: (batch, q_tile, head_group); head_group is the trailing reduction.
    qi = pl.program_id(1)
    hg = pl.program_id(2)
    hd = head_dim
    G = heads_per_step
    Ghd = G * hd

    @pl.when(hg == 0)
    def _():
        acc_ref[...] = jnp.zeros_like(acc_ref)

    # --- K/V cache: computed once per (batch, head-group), reused by every
    # query tile.  Requires the q-tile grid axis to iterate sequentially
    # (dimension_semantics "arbitrary"), so qi == 0 always runs first.
    @pl.when(qi == 0)
    def _():
        xkv = xkv_ref[0]                                     # (N, C)  bf16
        wk = wqkv_ref[hg, :, 1 * Ghd:2 * Ghd]                # (C, Ghd) bf16
        wv = wqkv_ref[hg, :, 2 * Ghd:3 * Ghd]
        kcache_ref[hg] = jnp.dot(
            xkv, wk, preferred_element_type=jnp.float32).astype(jnp.bfloat16)
        vcache_ref[hg] = jnp.dot(
            xkv, wv, preferred_element_type=jnp.float32).astype(jnp.bfloat16)

    # --- Q projection for this query tile / head group.  The query tile is a
    # row slice of the already-resident (N, C) activation block (no separate
    # xq input stream).  The softmax scale is folded into wq on the host.
    q_start = pl.multiple_of(qi * tq, tq)
    xq = xkv_ref[0, pl.ds(q_start, tq), :]                   # (tq, C) bf16
    wq = wqkv_ref[hg, :, 0 * Ghd:1 * Ghd]                    # (C, Ghd) bf16
    q_all = jnp.dot(
        xq, wq, preferred_element_type=jnp.float32).astype(jnp.bfloat16)

    # --- Per-head scores / softmax / context.  The G heads are unrolled so the
    # scheduler can overlap one head's EUP exp with the next head's MXU work.
    for g in range(G):
        lo, hi = g * hd, (g + 1) * hd
        q_h = q_all[:, lo:hi]                                # (tq, hd) bf16
        k_h = kcache_ref[hg, :, lo:hi]                       # (N,  hd) bf16
        v_h = vcache_ref[hg, :, lo:hi]                       # (N,  hd) bf16

        s = jax.lax.dot_general(                             # (tq, N) f32
            q_h, k_h, (((1,), (1,)), ((), ())),
            preferred_element_type=jnp.float32)

        # f32 softmax (matches attn.softmax(dim=-1, dtype=float32)); the
        # normalization is deferred to the small (tq, hd) context tile.
        m = jnp.max(s, axis=-1, keepdims=True)
        p = jnp.exp(s - m)
        denom = jnp.sum(p, axis=-1, keepdims=True)

        ctx = jnp.dot(p.astype(jnp.bfloat16), v_h,           # (tq, hd) f32
                      preferred_element_type=jnp.float32)
        ctx = ctx * pl.reciprocal(denom, approx=True)        # EUP slot, ~free
        ctx_ref[:, lo:hi] = ctx.astype(jnp.bfloat16)

    # --- Output projection for the whole head group: one (tq, G*hd) x (G*hd, C)
    # MXU matmul (contraction depth G*hd instead of hd), accumulated in f32.
    acc_ref[...] += jnp.dot(ctx_ref[...], wproj_ref[hg],
                            preferred_element_type=jnp.float32)

    @pl.when(hg == pl.num_programs(2) - 1)
    def _():
        o_ref[0] = (acc_ref[...] + bproj_ref[...]).astype(o_ref.dtype)


def alt_attention(x, wqkv_t, wproj_t, bproj, *, num_heads):
    """x: (B, N, C); wqkv_t: (C, 3C); wproj_t: (C, C); bproj: (1, C)."""
    B, N, C = x.shape
    H = num_heads
    assert C % H == 0, "channels must be divisible by num_heads"
    hd = C // H
    scale = hd ** (-0.5)

    # Heads per grid step: deeper out-proj contraction + fewer grid steps.
    G = 4 if H % 4 == 0 else (2 if H % 2 == 0 else 1)
    HG = H // G
    Ghd = G * hd

    # Query tile: 128 keeps the (tq, N) f32 score tile small enough for v7x's
    # 64 MiB VMEM; fall back to a single full tile for small / ragged N.
    if N % 128 == 0:
        tq = 128
    else:
        tq = N
        assert N * N * 4 <= 8 * 1024 * 1024, (
            "ragged sequence length too large for the single-tile fallback; "
            "pad N to a multiple of 128")
    nq = N // tq

    # Host-side weight packing (per head group, [q | k | v] on the lane axis)
    # with the softmax scale folded into the q columns.
    wq = (wqkv_t[:, 0 * C:1 * C] * scale).reshape(C, HG, Ghd)
    wk = wqkv_t[:, 1 * C:2 * C].reshape(C, HG, Ghd)
    wv = wqkv_t[:, 2 * C:3 * C].reshape(C, HG, Ghd)
    wqkv_g = jnp.concatenate([wq, wk, wv], axis=-1).transpose(1, 0, 2)
    wqkv_g = wqkv_g.astype(jnp.bfloat16)                     # (HG, C, 3*Ghd)
    wproj_g = wproj_t.reshape(HG, Ghd, C).astype(jnp.bfloat16)
    bproj_f32 = bproj.reshape(1, C).astype(jnp.float32)
    x_bf16 = x.astype(jnp.bfloat16)

    kernel = functools.partial(_alt_attention_kernel, head_dim=hd,
                               heads_per_step=G, tq=tq)

    out_itemsize = jnp.dtype(x.dtype).itemsize
    cost = pl.CostEstimate(
        flops=int(B * (6 * N * C * C + 4 * N * N * C + 2 * N * C * C)),
        transcendentals=int(B * H * N * N),
        bytes_accessed=int(B * N * C * 2 + HG * C * 3 * Ghd * 2
                           + HG * Ghd * C * 2 + C * 4
                           + B * N * C * out_itemsize),
    )

    # VMEM plan from the actual resident set (weights + activation block +
    # K/V caches + accumulators + f32 intermediates), capped at 64 MiB (v7x).
    resident = (
        2 * (N * C * 2)                  # (1, N, C) bf16 activation block x2 bufs
        + 2 * (tq * C * out_itemsize)    # output block x2 bufs
        + HG * C * 3 * Ghd * 2           # resident qkv weights (bf16)
        + HG * Ghd * C * 2               # resident proj weights (bf16)
        + C * 4                          # resident bias (f32)
        + 2 * (HG * N * Ghd * 2)         # K and V caches (bf16)
        + tq * Ghd * 2                   # ctx staging (bf16)
        + tq * C * 4                     # f32 out-proj accumulator
    )
    transient = 4 * (2 * tq * N + tq * Ghd + 2 * N * Ghd + tq * hd + tq * C)
    vmem_limit = int(min(64 * 1024 * 1024,
                         max(32 * 1024 * 1024, 2 * (resident + transient))))

    return pl.pallas_call(
        kernel,
        out_shape=jax.ShapeDtypeStruct((B, N, C), x.dtype),
        grid_spec=pltpu.PrefetchScalarGridSpec(
            num_scalar_prefetch=0,
            grid=(B, nq, HG),
            in_specs=[
                # activations: one (N, C) block per batch, resident across qi/hg
                pl.BlockSpec((1, N, C), lambda b, qi, hg: (b, 0, 0)),
                # weights / bias: constant block index -> fully VMEM-resident
                pl.BlockSpec((HG, C, 3 * Ghd), lambda b, qi, hg: (0, 0, 0)),
                pl.BlockSpec((HG, Ghd, C), lambda b, qi, hg: (0, 0, 0)),
                pl.BlockSpec((1, C), lambda b, qi, hg: (0, 0)),
            ],
            out_specs=pl.BlockSpec((1, tq, C), lambda b, qi, hg: (b, qi, 0)),
            scratch_shapes=[
                pltpu.VMEM((HG, N, Ghd), jnp.bfloat16),     # K cache
                pltpu.VMEM((HG, N, Ghd), jnp.bfloat16),     # V cache
                pltpu.VMEM((tq, Ghd), jnp.bfloat16),        # ctx staging
                pltpu.VMEM((tq, C), jnp.float32),           # out-proj accumulator
            ],
        ),
        compiler_params=pltpu.CompilerParams(
            # qi must be sequential ("arbitrary") for the qi==0 K/V-cache fill;
            # batch stays "parallel" for megacore sharding.
            dimension_semantics=("parallel", "arbitrary", "arbitrary"),
            vmem_limit_bytes=vmem_limit,
        ),
        cost_estimate=cost,
    )(x_bf16, wqkv_g, wproj_g, bproj_f32)


def alt_attention_ref(x, wqkv_t, wproj_t, bproj, *, num_heads):
    """Pure-JAX f32 reference mirroring the PyTorch forward."""
    B, N, C = x.shape
    H = num_heads
    hd = C // H
    scale = hd ** (-0.5)
    qkv = x @ wqkv_t                                            # (B, N, 3C)
    qkv = qkv.reshape(B, N, 3, H, hd).transpose(2, 0, 3, 1, 4)  # (3, B, H, N, hd)
    q, k, v = qkv[0], qkv[1], qkv[2]
    attn = (q * scale) @ jnp.swapaxes(k, -2, -1)                # (B, H, N, N)
    attn = jax.nn.softmax(attn.astype(jnp.float32), axis=-1)
    ctx = (attn @ v).transpose(0, 2, 1, 3).reshape(B, N, C)
    return ctx @ wproj_t + bproj


if __name__ == "__main__":
    B, N, C, H = 2, 8, 32, 8

    key = jax.random.PRNGKey(0)
    kx, kqkv, kproj, kb = jax.random.split(key, 4)

    x = jax.random.normal(kx, (B, N, C), dtype=jnp.float32)
    # Deterministic "Linear" parameters (already stored transposed for x @ W).
    wqkv_t = jax.random.normal(kqkv, (C, 3 * C), dtype=jnp.float32) * 0.05
    wproj_t = jax.random.normal(kproj, (C, C), dtype=jnp.float32) * 0.05
    bproj = jax.random.normal(kb, (1, C), dtype=jnp.float32) * 0.05

    out = alt_attention(x, wqkv_t, wproj_t, bproj, num_heads=H)
    out = jax.block_until_ready(out)

    ref = alt_attention_ref(x, wqkv_t, wproj_t, bproj, num_heads=H)
    assert out.shape == (B, N, C)
    # bf16 MXU inputs + approx reciprocal -> relaxed tolerance vs f32 reference.
    assert jnp.allclose(out, ref, atol=2e-2, rtol=2e-2), "mismatch vs reference"

    print("KERNEL_OK")
</pallas_src>

<mosaic_0001>
module attributes {stable_mosaic.version = 11 : i64} {
  func.func @_alt_attention_kernel(%arg0: i32, %arg1: i32, %arg2: i32, %arg3: memref<1x8x32xbf16, #tpu.memory_space<vmem>>, %arg4: memref<2x32x48xbf16, #tpu.memory_space<vmem>>, %arg5: memref<2x16x32xbf16, #tpu.memory_space<vmem>>, %arg6: memref<1x32xf32, #tpu.memory_space<vmem>>, %arg7: memref<1x8x32xf32, #tpu.memory_space<vmem>>, %arg8: memref<2x8x16xbf16, #tpu.memory_space<vmem>>, %arg9: memref<2x8x16xbf16, #tpu.memory_space<vmem>>, %arg10: memref<8x16xbf16, #tpu.memory_space<vmem>>, %arg11: memref<8x32xf32, #tpu.memory_space<vmem>>) attributes {dimension_semantics = [#tpu.dimension_semantics<parallel>, #tpu.dimension_semantics<arbitrary>, #tpu.dimension_semantics<arbitrary>], iteration_bounds = array<i64: 2, 1, 2>, scalar_prefetch = 0 : i64, scratch_operands = 4 : i64, tpu.core_type = #tpu.core_type<tc>, window_params = [{transform_indices = @transform_0, window_bounds = array<i64: 1, 8, 32>}, {pipeline_mode = #tpu.pipeline_mode<synchronous>, transform_indices = @transform_1, window_bounds = array<i64: 2, 32, 48>}, {pipeline_mode = #tpu.pipeline_mode<synchronous>, transform_indices = @transform_2, window_bounds = array<i64: 2, 16, 32>}, {pipeline_mode = #tpu.pipeline_mode<synchronous>, transform_indices = @transform_3, window_bounds = array<i64: 1, 32>}, {transform_indices = @transform_4, window_bounds = array<i64: 1, 8, 32>}]} {
    %c0_i32 = arith.constant 0 : i32
    %0 = arith.cmpi eq, %arg2, %c0_i32 : i32
    %1 = arith.extui %0 : i1 to i32
    %c0_i32_0 = arith.constant 0 : i32
    %2 = arith.cmpi ne, %1, %c0_i32_0 : i32
    scf.if %2 {
      %cst_53 = arith.constant 0.000000e+00 : f32
      %115 = vector.broadcast %cst_53 : f32 to vector<8x32xf32>
      %c0_54 = arith.constant 0 : index
      %c0_55 = arith.constant 0 : index
      %116 = vector.load %arg11[%c0_54, %c0_55] : memref<8x32xf32, #tpu.memory_space<vmem>>, vector<8x32xf32>
      tpu.vector_store %arg11[%c0_54, %c0_55], %115 {strides = array<i32>} : memref<8x32xf32, #tpu.memory_space<vmem>>, vector<8x32xf32>,
    } else {
    }
    %c0_i32_1 = arith.constant 0 : i32
    %3 = arith.cmpi eq, %arg1, %c0_i32_1 : i32
    %4 = arith.extui %3 : i1 to i32
    %c0_i32_2 = arith.constant 0 : i32
    %5 = arith.cmpi ne, %4, %c0_i32_2 : i32
    scf.if %5 {
      %c0_53 = arith.constant 0 : index
      %c0_54 = arith.constant 0 : index
      %c0_55 = arith.constant 0 : index
      %115 = vector.load %arg3[%c0_53, %c0_54, %c0_55] : memref<1x8x32xbf16, #tpu.memory_space<vmem>>, vector<1x8x32xbf16>
      %116 = vector.shape_cast %115 : vector<1x8x32xbf16> to vector<8x32xbf16>
      %117 = arith.index_cast %arg2 : i32 to index
      %c0_56 = arith.constant 0 : index
      %c16 = arith.constant 16 : index
      %118 = vector.load %arg4[%117, %c0_56, %c16] : memref<2x32x48xbf16, #tpu.memory_space<vmem>>, vector<1x32x16xbf16>
      %119 = vector.shape_cast %118 : vector<1x32x16xbf16> to vector<32x16xbf16>
      %120 = arith.index_cast %arg2 : i32 to index
      %c0_57 = arith.constant 0 : index
      %c32 = arith.constant 32 : index
      %121 = vector.load %arg4[%120, %c0_57, %c32] : memref<2x32x48xbf16, #tpu.memory_space<vmem>>, vector<1x32x16xbf16>
      %122 = vector.shape_cast %121 : vector<1x32x16xbf16> to vector<32x16xbf16>
      %cst_58 = arith.constant dense<0.000000e+00> : vector<8x16xf32>
      %123 = tpu.matmul %116, %119, %cst_58 {dimension_numbers = #tpu.dot_dimension_numbers<[1], [0], [0], [1], [0, 0, 1, 1], [], []>} : vector<8x32xbf16>, vector<32x16xbf16>, vector<8x16xf32> -> vector<8x16xf32>
      %124 = arith.truncf %123 : vector<8x16xf32> to vector<8x16xbf16>
      %125 = arith.index_cast %arg2 : i32 to index
      %c0_59 = arith.constant 0 : index
      %c0_60 = arith.constant 0 : index
      %126 = vector.load %arg8[%125, %c0_59, %c0_60] : memref<2x8x16xbf16, #tpu.memory_space<vmem>>, vector<1x8x16xbf16>
      %127 = vector.shape_cast %126 : vector<1x8x16xbf16> to vector<8x16xbf16>
      %128 = vector.shape_cast %124 : vector<8x16xbf16> to vector<1x8x16xbf16>
      tpu.vector_store %arg8[%125, %c0_59, %c0_60], %128 {strides = array<i32>} : memref<2x8x16xbf16, #tpu.memory_space<vmem>>, vector<1x8x16xbf16>,
      %cst_61 = arith.constant dense<0.000000e+00> : vector<8x16xf32>
      %129 = tpu.matmul %116, %122, %cst_61 {dimension_numbers = #tpu.dot_dimension_numbers<[1], [0], [0], [1], [0, 0, 1, 1], [], []>} : vector<8x32xbf16>, vector<32x16xbf16>, vector<8x16xf32> -> vector<8x16xf32>
      %130 = arith.truncf %129 : vector<8x16xf32> to vector<8x16xbf16>
      %131 = arith.index_cast %arg2 : i32 to index
      %c0_62 = arith.constant 0 : index
      %c0_63 = arith.constant 0 : index
      %132 = vector.load %arg9[%131, %c0_62, %c0_63] : memref<2x8x16xbf16, #tpu.memory_space<vmem>>, vector<1x8x16xbf16>
      %133 = vector.shape_cast %132 : vector<1x8x16xbf16> to vector<8x16xbf16>
      %134 = vector.shape_cast %130 : vector<8x16xbf16> to vector<1x8x16xbf16>
      tpu.vector_store %arg9[%131, %c0_62, %c0_63], %134 {strides = array<i32>} : memref<2x8x16xbf16, #tpu.memory_space<vmem>>, vector<1x8x16xbf16>,
    } else {
    }
    %c8_i32 = arith.constant 8 : i32
    %6 = arith.muli %arg1, %c8_i32 : i32
    %7 = tpu.assume_multiple %6, 8 : i32
    %c0 = arith.constant 0 : index
    %8 = arith.index_cast %7 : i32 to index
    %c0_3 = arith.constant 0 : index
    %9 = vector.load %arg3[%c0, %8, %c0_3] : memref<1x8x32xbf16, #tpu.memory_space<vmem>>, vector<1x8x32xbf16>
    %10 = vector.shape_cast %9 : vector<1x8x32xbf16> to vector<8x32xbf16>
    %11 = arith.index_cast %arg2 : i32 to index
    %c0_4 = arith.constant 0 : index
    %c0_5 = arith.constant 0 : index
    %12 = vector.load %arg4[%11, %c0_4, %c0_5] : memref<2x32x48xbf16, #tpu.memory_space<vmem>>, vector<1x32x16xbf16>
    %13 = vector.shape_cast %12 : vector<1x32x16xbf16> to vector<32x16xbf16>
    %cst = arith.constant dense<0.000000e+00> : vector<8x16xf32>
    %14 = tpu.matmul %10, %13, %cst {dimension_numbers = #tpu.dot_dimension_numbers<[1], [0], [0], [1], [0, 0, 1, 1], [], []>} : vector<8x32xbf16>, vector<32x16xbf16>, vector<8x16xf32> -> vector<8x16xf32>
    %15 = arith.truncf %14 : vector<8x16xf32> to vector<8x16xbf16>
    %16 = vector.extract_strided_slice %15 {offsets = [0, 0], sizes = [8, 4], strides = [1, 1]} : vector<8x16xbf16> to vector<8x4xbf16>
    %17 = arith.index_cast %arg2 : i32 to index
    %c0_6 = arith.constant 0 : index
    %c0_7 = arith.constant 0 : index
    %18 = vector.load %arg8[%17, %c0_6, %c0_7] : memref<2x8x16xbf16, #tpu.memory_space<vmem>>, vector<1x8x4xbf16>
    %19 = vector.shape_cast %18 : vector<1x8x4xbf16> to vector<8x4xbf16>
    %20 = arith.index_cast %arg2 : i32 to index
    %c0_8 = arith.constant 0 : index
    %c0_9 = arith.constant 0 : index
    %21 = vector.load %arg9[%20, %c0_8, %c0_9] : memref<2x8x16xbf16, #tpu.memory_space<vmem>>, vector<1x8x4xbf16>
    %22 = vector.shape_cast %21 : vector<1x8x4xbf16> to vector<8x4xbf16>
    %cst_10 = arith.constant dense<0.000000e+00> : vector<8x8xf32>
    %23 = tpu.matmul %16, %19, %cst_10 {dimension_numbers = #tpu.dot_dimension_numbers<[1], [1], [0], [0], [0, 0, 1, 0], [], []>} : vector<8x4xbf16>, vector<8x4xbf16>, vector<8x8xf32> -> vector<8x8xf32>
    %cst_11 = arith.constant dense<0xFF800000> : vector<8xf32>
    %24 = vector.multi_reduction <maximumf>, %23, %cst_11 [1] : vector<8x8xf32> to vector<8xf32>
    %25 = vector.shape_cast %24 : vector<8xf32> to vector<8x1xf32>
    %26 = vector.broadcast %25 : vector<8x1xf32> to vector<8x8xf32>
    %27 = arith.subf %23, %26 : vector<8x8xf32>
    %28 = math.exp %27 : vector<8x8xf32>
    %cst_12 = arith.constant dense<0.000000e+00> : vector<8xf32>
    %29 = vector.multi_reduction <add>, %28, %cst_12 [1] : vector<8x8xf32> to vector<8xf32>
    %30 = vector.shape_cast %29 : vector<8xf32> to vector<8x1xf32>
    %31 = arith.truncf %28 : vector<8x8xf32> to vector<8x8xbf16>
    %cst_13 = arith.constant dense<0.000000e+00> : vector<8x4xf32>
    %32 = tpu.matmul %31, %22, %cst_13 {dimension_numbers = #tpu.dot_dimension_numbers<[1], [0], [0], [1], [0, 0, 1, 1], [], []>} : vector<8x8xbf16>, vector<8x4xbf16>, vector<8x4xf32> -> vector<8x4xf32>
    %33 = tpu.reciprocal %30 {approx = true} : vector<8x1xf32> -> vector<8x1xf32>
    %34 = vector.broadcast %33 : vector<8x1xf32> to vector<8x4xf32>
    %35 = arith.mulf %32, %34 : vector<8x4xf32>
    %36 = arith.truncf %35 : vector<8x4xf32> to vector<8x4xbf16>
    %c0_14 = arith.constant 0 : index
    %c0_15 = arith.constant 0 : index
    %37 = vector.load %arg10[%c0_14, %c0_15] : memref<8x16xbf16, #tpu.memory_space<vmem>>, vector<8x4xbf16>
    tpu.vector_store %arg10[%c0_14, %c0_15], %36 {strides = array<i32>} : memref<8x16xbf16, #tpu.memory_space<vmem>>, vector<8x4xbf16>,
    %38 = vector.extract_strided_slice %15 {offsets = [0, 4], sizes = [8, 4], strides = [1, 1]} : vector<8x16xbf16> to vector<8x4xbf16>
    %39 = arith.index_cast %arg2 : i32 to index
    %c0_16 = arith.constant 0 : index
    %c4 = arith.constant 4 : index
    %40 = vector.load %arg8[%39, %c0_16, %c4] : memref<2x8x16xbf16, #tpu.memory_space<vmem>>, vector<1x8x4xbf16>
    %41 = vector.shape_cast %40 : vector<1x8x4xbf16> to vector<8x4xbf16>
    %42 = arith.index_cast %arg2 : i32 to index
    %c0_17 = arith.constant 0 : index
    %c4_18 = arith.constant 4 : index
    %43 = vector.load %arg9[%42, %c0_17, %c4_18] : memref<2x8x16xbf16, #tpu.memory_space<vmem>>, vector<1x8x4xbf16>
    %44 = vector.shape_cast %43 : vector<1x8x4xbf16> to vector<8x4xbf16>
    %cst_19 = arith.constant dense<0.000000e+00> : vector<8x8xf32>
    %45 = tpu.matmul %38, %41, %cst_19 {dimension_numbers = #tpu.dot_dimension_numbers<[1], [1], [0], [0], [0, 0, 1, 0], [], []>} : vector<8x4xbf16>, vector<8x4xbf16>, vector<8x8xf32> -> vector<8x8xf32>
    %cst_20 = arith.constant dense<0xFF800000> : vector<8xf32>
    %46 = vector.multi_reduction <maximumf>, %45, %cst_20 [1] : vector<8x8xf32> to vector<8xf32>
    %47 = vector.shape_cast %46 : vector<8xf32> to vector<8x1xf32>
    %48 = vector.broadcast %47 : vector<8x1xf32> to vector<8x8xf32>
    %49 = arith.subf %45, %48 : vector<8x8xf32>
    %50 = math.exp %49 : vector<8x8xf32>
    %cst_21 = arith.constant dense<0.000000e+00> : vector<8xf32>
    %51 = vector.multi_reduction <add>, %50, %cst_21 [1] : vector<8x8xf32> to vector<8xf32>
    %52 = vector.shape_cast %51 : vector<8xf32> to vector<8x1xf32>
    %53 = arith.truncf %50 : vector<8x8xf32> to vector<8x8xbf16>
    %cst_22 = arith.constant dense<0.000000e+00> : vector<8x4xf32>
    %54 = tpu.matmul %53, %44, %cst_22 {dimension_numbers = #tpu.dot_dimension_numbers<[1], [0], [0], [1], [0, 0, 1, 1], [], []>} : vector<8x8xbf16>, vector<8x4xbf16>, vector<8x4xf32> -> vector<8x4xf32>
    %55 = tpu.reciprocal %52 {approx = true} : vector<8x1xf32> -> vector<8x1xf32>
    %56 = vector.broadcast %55 : vector<8x1xf32> to vector<8x4xf32>
    %57 = arith.mulf %54, %56 : vector<8x4xf32>
    %58 = arith.truncf %57 : vector<8x4xf32> to vector<8x4xbf16>
    %c0_23 = arith.constant 0 : index
    %c4_24 = arith.constant 4 : index
    %59 = vector.load %arg10[%c0_23, %c4_24] : memref<8x16xbf16, #tpu.memory_space<vmem>>, vector<8x4xbf16>
    tpu.vector_store %arg10[%c0_23, %c4_24], %58 {strides = array<i32>} : memref<8x16xbf16, #tpu.memory_space<vmem>>, vector<8x4xbf16>,
    %60 = vector.extract_strided_slice %15 {offsets = [0, 8], sizes = [8, 4], strides = [1, 1]} : vector<8x16xbf16> to vector<8x4xbf16>
    %61 = arith.index_cast %arg2 : i32 to index
    %c0_25 = arith.constant 0 : index
    %c8 = arith.constant 8 : index
    %62 = vector.load %arg8[%61, %c0_25, %c8] : memref<2x8x16xbf16, #tpu.memory_space<vmem>>, vector<1x8x4xbf16>
    %63 = vector.shape_cast %62 : vector<1x8x4xbf16> to vector<8x4xbf16>
    %64 = arith.index_cast %arg2 : i32 to index
    %c0_26 = arith.constant 0 : index
    %c8_27 = arith.constant 8 : index
    %65 = vector.load %arg9[%64, %c0_26, %c8_27] : memref<2x8x16xbf16, #tpu.memory_space<vmem>>, vector<1x8x4xbf16>
    %66 = vector.shape_cast %65 : vector<1x8x4xbf16> to vector<8x4xbf16>
    %cst_28 = arith.constant dense<0.000000e+00> : vector<8x8xf32>
    %67 = tpu.matmul %60, %63, %cst_28 {dimension_numbers = #tpu.dot_dimension_numbers<[1], [1], [0], [0], [0, 0, 1, 0], [], []>} : vector<8x4xbf16>, vector<8x4xbf16>, vector<8x8xf32> -> vector<8x8xf32>
    %cst_29 = arith.constant dense<0xFF800000> : vector<8xf32>
    %68 = vector.multi_reduction <maximumf>, %67, %cst_29 [1] : vector<8x8xf32> to vector<8xf32>
    %69 = vector.shape_cast %68 : vector<8xf32> to vector<8x1xf32>
    %70 = vector.broadcast %69 : vector<8x1xf32> to vector<8x8xf32>
    %71 = arith.subf %67, %70 : vector<8x8xf32>
    %72 = math.exp %71 : vector<8x8xf32>
    %cst_30 = arith.constant dense<0.000000e+00> : vector<8xf32>
    %73 = vector.multi_reduction <add>, %72, %cst_30 [1] : vector<8x8xf32> to vector<8xf32>
    %74 = vector.shape_cast %73 : vector<8xf32> to vector<8x1xf32>
    %75 = arith.truncf %72 : vector<8x8xf32> to vector<8x8xbf16>
    %cst_31 = arith.constant dense<0.000000e+00> : vector<8x4xf32>
    %76 = tpu.matmul %75, %66, %cst_31 {dimension_numbers = #tpu.dot_dimension_numbers<[1], [0], [0], [1], [0, 0, 1, 1], [], []>} : vector<8x8xbf16>, vector<8x4xbf16>, vector<8x4xf32> -> vector<8x4xf32>
    %77 = tpu.reciprocal %74 {approx = true} : vector<8x1xf32> -> vector<8x1xf32>
    %78 = vector.broadcast %77 : vector<8x1xf32> to vector<8x4xf32>
    %79 = arith.mulf %76, %78 : vector<8x4xf32>
    %80 = arith.truncf %79 : vector<8x4xf32> to vector<8x4xbf16>
    %c0_32 = arith.constant 0 : index
    %c8_33 = arith.constant 8 : index
    %81 = vector.load %arg10[%c0_32, %c8_33] : memref<8x16xbf16, #tpu.memory_space<vmem>>, vector<8x4xbf16>
    tpu.vector_store %arg10[%c0_32, %c8_33], %80 {strides = array<i32>} : memref<8x16xbf16, #tpu.memory_space<vmem>>, vector<8x4xbf16>,
    %82 = vector.extract_strided_slice %15 {offsets = [0, 12], sizes = [8, 4], strides = [1, 1]} : vector<8x16xbf16> to vector<8x4xbf16>
    %83 = arith.index_cast %arg2 : i32 to index
    %c0_34 = arith.constant 0 : index
    %c12 = arith.constant 12 : index
    %84 = vector.load %arg8[%83, %c0_34, %c12] : memref<2x8x16xbf16, #tpu.memory_space<vmem>>, vector<1x8x4xbf16>
    %85 = vector.shape_cast %84 : vector<1x8x4xbf16> to vector<8x4xbf16>
    %86 = arith.index_cast %arg2 : i32 to index
    %c0_35 = arith.constant 0 : index
    %c12_36 = arith.constant 12 : index
    %87 = vector.load %arg9[%86, %c0_35, %c12_36] : memref<2x8x16xbf16, #tpu.memory_space<vmem>>, vector<1x8x4xbf16>
    %88 = vector.shape_cast %87 : vector<1x8x4xbf16> to vector<8x4xbf16>
    %cst_37 = arith.constant dense<0.000000e+00> : vector<8x8xf32>
    %89 = tpu.matmul %82, %85, %cst_37 {dimension_numbers = #tpu.dot_dimension_numbers<[1], [1], [0], [0], [0, 0, 1, 0], [], []>} : vector<8x4xbf16>, vector<8x4xbf16>, vector<8x8xf32> -> vector<8x8xf32>
    %cst_38 = arith.constant dense<0xFF800000> : vector<8xf32>
    %90 = vector.multi_reduction <maximumf>, %89, %cst_38 [1] : vector<8x8xf32> to vector<8xf32>
    %91 = vector.shape_cast %90 : vector<8xf32> to vector<8x1xf32>
    %92 = vector.broadcast %91 : vector<8x1xf32> to vector<8x8xf32>
    %93 = arith.subf %89, %92 : vector<8x8xf32>
    %94 = math.exp %93 : vector<8x8xf32>
    %cst_39 = arith.constant dense<0.000000e+00> : vector<8xf32>
    %95 = vector.multi_reduction <add>, %94, %cst_39 [1] : vector<8x8xf32> to vector<8xf32>
    %96 = vector.shape_cast %95 : vector<8xf32> to vector<8x1xf32>
    %97 = arith.truncf %94 : vector<8x8xf32> to vector<8x8xbf16>
    %cst_40 = arith.constant dense<0.000000e+00> : vector<8x4xf32>
    %98 = tpu.matmul %97, %88, %cst_40 {dimension_numbers = #tpu.dot_dimension_numbers<[1], [0], [0], [1], [0, 0, 1, 1], [], []>} : vector<8x8xbf16>, vector<8x4xbf16>, vector<8x4xf32> -> vector<8x4xf32>
    %99 = tpu.reciprocal %96 {approx = true} : vector<8x1xf32> -> vector<8x1xf32>
    %100 = vector.broadcast %99 : vector<8x1xf32> to vector<8x4xf32>
    %101 = arith.mulf %98, %100 : vector<8x4xf32>
    %102 = arith.truncf %101 : vector<8x4xf32> to vector<8x4xbf16>
    %c0_41 = arith.constant 0 : index
    %c12_42 = arith.constant 12 : index
    %103 = vector.load %arg10[%c0_41, %c12_42] : memref<8x16xbf16, #tpu.memory_space<vmem>>, vector<8x4xbf16>
    tpu.vector_store %arg10[%c0_41, %c12_42], %102 {strides = array<i32>} : memref<8x16xbf16, #tpu.memory_space<vmem>>, vector<8x4xbf16>,
    %c0_43 = arith.constant 0 : index
    %c0_44 = arith.constant 0 : index
    %104 = vector.load %arg11[%c0_43, %c0_44] : memref<8x32xf32, #tpu.memory_space<vmem>>, vector<8x32xf32>
    %c0_45 = arith.constant 0 : index
    %c0_46 = arith.constant 0 : index
    %105 = vector.load %arg10[%c0_45, %c0_46] : memref<8x16xbf16, #tpu.memory_space<vmem>>, vector<8x16xbf16>
    %106 = arith.index_cast %arg2 : i32 to index
    %c0_47 = arith.constant 0 : index
    %c0_48 = arith.constant 0 : index
    %107 = vector.load %arg5[%106, %c0_47, %c0_48] : memref<2x16x32xbf16, #tpu.memory_space<vmem>>, vector<1x16x32xbf16>
    %108 = vector.shape_cast %107 : vector<1x16x32xbf16> to vector<16x32xbf16>
    %cst_49 = arith.constant dense<0.000000e+00> : vector<8x32xf32>
    %109 = tpu.matmul %105, %108, %cst_49 {dimension_numbers = #tpu.dot_dimension_numbers<[1], [0], [0], [1], [0, 0, 1, 1], [], []>} : vector<8x16xbf16>, vector<16x32xbf16>, vector<8x32xf32> -> vector<8x32xf32>
    %110 = arith.addf %104, %109 : vector<8x32xf32>
    %c0_50 = arith.constant 0 : index
    %c0_51 = arith.constant 0 : index
    %111 = vector.load %arg11[%c0_50, %c0_51] : memref<8x32xf32, #tpu.memory_space<vmem>>, vector<8x32xf32>
    tpu.vector_store %arg11[%c0_50, %c0_51], %110 {strides = array<i32>} : memref<8x32xf32, #tpu.memory_space<vmem>>, vector<8x32xf32>,
    %c1_i32 = arith.constant 1 : i32
    %112 = arith.cmpi eq, %arg2, %c1_i32 : i32
    %113 = arith.extui %112 : i1 to i32
    %c0_i32_52 = arith.constant 0 : i32
    %114 = arith.cmpi ne, %113, %c0_i32_52 : i32
    scf.if %114 {
      %c0_53 = arith.constant 0 : index
      %c0_54 = arith.constant 0 : index
      %115 = vector.load %arg11[%c0_53, %c0_54] : memref<8x32xf32, #tpu.memory_space<vmem>>, vector<8x32xf32>
      %c0_55 = arith.constant 0 : index
      %c0_56 = arith.constant 0 : index
      %116 = vector.load %arg6[%c0_55, %c0_56] : memref<1x32xf32, #tpu.memory_space<vmem>>, vector<1x32xf32>
      %117 = vector.broadcast %116 : vector<1x32xf32> to vector<8x32xf32>
      %118 = arith.addf %115, %117 : vector<8x32xf32>
      %c0_57 = arith.constant 0 : index
      %c0_58 = arith.constant 0 : index
      %c0_59 = arith.constant 0 : index
      %119 = vector.load %arg7[%c0_57, %c0_58, %c0_59] : memref<1x8x32xf32, #tpu.memory_space<vmem>>, vector<1x8x32xf32>
      %120 = vector.shape_cast %119 : vector<1x8x32xf32> to vector<8x32xf32>
      %121 = vector.shape_cast %118 : vector<8x32xf32> to vector<1x8x32xf32>
      tpu.vector_store %arg7[%c0_57, %c0_58, %c0_59], %121 {strides = array<i32>} : memref<1x8x32xf32, #tpu.memory_space<vmem>>, vector<1x8x32xf32>,
    } else {
    }
    return
  }
  func.func @transform_0(%arg0: i32, %arg1: i32, %arg2: i32) -> (i32, i32, i32) {
    %c0_i32 = arith.constant 0 : i32
    %c0_i32_0 = arith.constant 0 : i32
    %c0_i32_1 = arith.constant 0 : i32
    return %arg0, %c0_i32, %c0_i32_0 : i32, i32, i32
  }
  func.func @transform_1(%arg0: i32, %arg1: i32, %arg2: i32) -> (i32, i32, i32) {
    %c0_i32 = arith.constant 0 : i32
    %c0_i32_0 = arith.constant 0 : i32
    %c0_i32_1 = arith.constant 0 : i32
    %c0_i32_2 = arith.constant 0 : i32
    return %c0_i32, %c0_i32_0, %c0_i32_1 : i32, i32, i32
  }
  func.func @transform_2(%arg0: i32, %arg1: i32, %arg2: i32) -> (i32, i32, i32) {
    %c0_i32 = arith.constant 0 : i32
    %c0_i32_0 = arith.constant 0 : i32
    %c0_i32_1 = arith.constant 0 : i32
    %c0_i32_2 = arith.constant 0 : i32
    return %c0_i32, %c0_i32_0, %c0_i32_1 : i32, i32, i32
  }
  func.func @transform_3(%arg0: i32, %arg1: i32, %arg2: i32) -> (i32, i32) {
    %c0_i32 = arith.constant 0 : i32
    %c0_i32_0 = arith.constant 0 : i32
    %c0_i32_1 = arith.constant 0 : i32
    return %c0_i32, %c0_i32_0 : i32, i32
  }
  func.func @transform_4(%arg0: i32, %arg1: i32, %arg2: i32) -> (i32, i32, i32) {
    %c0_i32 = arith.constant 0 : i32
    %c0_i32_0 = arith.constant 0 : i32
    return %arg0, %arg1, %c0_i32 : i32, i32, i32
  }
}

</mosaic_0001>

<llo_original>
// kernel: tpu_custom_call.1
$region0: #{tpu_custom_call.1}
  #allocation0 [shape = 'u32[]', space=smem, size = 0x4, offset = 0x4, fixed_abs, tag = 'smem constant byte address 0x4 - core index']
  #allocation1 [shape = 'u32[72,128]{1,0:T(1,128)}', space=vmem, size = 0x9000, scoped, tag = 'internal scratch']
  #allocation2 [shape = 'bf16[2,8,16]{2,1,0:T(8,128)(2,1)}', space=vmem, size = 0x1000, scoped, tag = 'scratch operand']
  #allocation3 [shape = 'bf16[2,8,16]{2,1,0:T(8,128)(2,1)}', space=vmem, size = 0x1000, scoped, tag = 'scratch operand']
  #allocation4 [shape = 'bf16[8,16]{1,0:T(8,128)(2,1)}', space=vmem, size = 0x800, scoped, tag = 'scratch operand']
  #allocation5 [shape = 'f32[8,32]{1,0:T(8,128)}', space=vmem, size = 0x1000, scoped, tag = 'scratch operand']
  %s0 = inlined_call_operand.hbm [shape: bf16[2,8,32], index: 0, kind: input, shape index: {}]
  %s1 = inlined_call_operand.hbm [shape: bf16[2,32,48], index: 1, kind: input, shape index: {}]
  %s2 = inlined_call_operand.hbm [shape: bf16[2,16,32], index: 2, kind: input, shape index: {}]
  %s3 = inlined_call_operand.vmem [shape: f32[1,32], index: 3, kind: input, shape index: {}]
  %s4 = inlined_call_operand.hbm [shape: f32[2,8,32], index: 4, kind: output, shape index: {}]
  %s5 = sld [smem:[#allocation0]]
  $region73: #{tpu_custom_call.1} parent=0
    _
  %s7 = ssub.s32 1, %s5
  %s8 = scalar_select 0, %s7, %s5
  $region1: #{tpu_custom_call.1} parent=0
    #allocation6 [shape = 'u8[4096]{0}', space=vmem, size = 0x1000, scoped, tag = 'input window, operand 0']
    #allocation7 [shape = 's32[2]{0}', space=sflag, size = 0x8, scoped, tag = 'scoped memory for tpu_custom_call.1']
    #allocation8 [shape = 's32[2]{0}', space=sflag, size = 0x8, scoped, tag = 'scoped memory for tpu_custom_call.1']
    #allocation9 [shape = 'u8[16384]{0}', space=vmem, size = 0x4000, scoped, tag = 'input window, operand 1, single buffered']
    #allocation10 [shape = 's32[1]{0}', space=sflag, size = 0x4, scoped, tag = 'scoped memory for tpu_custom_call.1']
    #allocation11 [shape = 'u8[8192]{0}', space=vmem, size = 0x2000, scoped, tag = 'input window, operand 2, single buffered']
    #allocation12 [shape = 'u8[8192]{0}', space=vmem, size = 0x2000, scoped, tag = 'output window, operand 0']
    %9 = vsyncpa [#allocation7], 0
    %s10 = scalar_lea.sflag [#allocation7], 1
    %11 = vsyncpa %s10, 0
    %12 = vsyncpa [#allocation10], 0
    %13 = vsyncpa [#allocation8], 0
    %s14 = scalar_lea.sflag [#allocation8], 1
    %15 = vsyncpa %s14, 0
    loop: start=0, step=1, limit=6
    $region2: #{tpu_custom_call.1} parent=1 // loop_pre_header
      _
    $region3: #{tpu_custom_call.1} parent=1 // loop_header
      %s17 = sphi 0, %s21
      %p18 = scmp.ge.s32.totalorder %s17, 6
      %s24 = sphi 0, %s43
      %s25 = sphi 0, %s39
      %s26 = sphi 0, %s35
      %s27 = sphi 0, %s24
      %s28 = sphi 0, %s25
      %s29 = sphi 0, %s26
      %s30 = sphi 0, %s27
      %s31 = sphi 0, %s28
      %s32 = sphi 0, %s29
      %s46 = sphi 0, %s48
      %s49 = sphi 0, %s46
      %s50 = sphi 0, %s49
      %s66 = sphi 0, %s50
      %s70 = sphi 0, %s70
      %s72 = sphi 0, %s70
      %s73 = sphi 0, %s72
      %s87 = sphi 0, %s73
      %s91 = sphi 0, %s91
      %s93 = sphi 0, %s91
      %s94 = sphi 0, %s93
      %s108 = sphi 0, %s94
      %s112 = sphi 0, %s112
      %s114 = sphi 0, %s112
      %s115 = sphi 0, %s114
      %s129 = sphi 0, %s115
      %s137 = sphi 0, %s139
      %s140 = sphi 0, %s137
      %s141 = sphi 0, %s140
      %s157 = sphi 0, %s141
    $region4: #{tpu_custom_call.1} parent=1 // loop_header_branch
      %20 = sbr.rel (%p18) target = $region8
    $region5: #{tpu_custom_call.1} parent=1 // loop_body
      %s22 = ssub.s32 %s17, 1
      %s23 = ssub.s32 %s17, 2
      %s33 = sadd.s32 1, %s26
      %p34 = scmp.ge.s32.totalorder %s33, 2
      %s35 = scalar_select %p34, 0, %s33
      %s36 = sadd.s32 1, %s25
      %s37 = scalar_select %p34, %s36, %s25
      %p38 = scmp.ge.s32.totalorder %s37, 1
      %s39 = scalar_select %p38, 0, %s37
      %s40 = sadd.s32 1, %s24
      %s41 = scalar_select %p38, %s40, %s24
      %p42 = scmp.ge.s32.totalorder %s41, 2
      %s43 = scalar_select %p42, 0, %s41
      %s44 = ssub.s32 %s24, %s43
      %p45 = scmp.eq.s32.totalorder %s44, 0
      %s47 = sadd.s32 %s46, 1
      %s48 = scalar_select %p45, %s46, %s47
      %p51 = pneg %p45
      %p52 = scmp.eq.s32.totalorder %s17, 3
      %p53 = por %p51, %p52
      %p54 = scmp.ne.s32.totalorder %s46, %s49
      %p55 = scmp.eq.s32.totalorder %s17, 0
      %p56 = por %p54, %p55
      %p57 = scmp.ne.s32.totalorder %s46, %s49
      %p58 = scmp.eq.s32.totalorder %s22, 3
      %p59 = por %p57, %p58
      %p60 = scmp.ne.s32.totalorder %s49, %s50
      %p61 = scmp.eq.s32.totalorder %s22, 0
      %p62 = por %p60, %p61
      %p63 = scmp.ne.s32.totalorder %s49, %s50
      %p64 = scmp.eq.s32.totalorder %s23, 3
      %p65 = por %p63, %p64
      %p67 = scmp.ne.s32.totalorder %s50, %s66
      %p68 = scmp.eq.s32.totalorder %s23, 0
      %p69 = por %p67, %p68
      %s71 = sadd.s32 %s70, 1
      %p74 = scmp.eq.s32.totalorder %s17, 3
      %p75 = scmp.ne.s32.totalorder %s70, %s72
      %p76 = scmp.eq.s32.totalorder %s17, 0
      %p77 = por %p75, %p76
      %p78 = scmp.ne.s32.totalorder %s70, %s72
      %p79 = scmp.eq.s32.totalorder %s22, 3
      %p80 = por %p78, %p79
      %p81 = scmp.ne.s32.totalorder %s72, %s73
      %p82 = scmp.eq.s32.totalorder %s22, 0
      %p83 = por %p81, %p82
      %p84 = scmp.ne.s32.totalorder %s72, %s73
      %p85 = scmp.eq.s32.totalorder %s23, 3
      %p86 = por %p84, %p85
      %p88 = scmp.ne.s32.totalorder %s73, %s87
      %p89 = scmp.eq.s32.totalorder %s23, 0
      %p90 = por %p88, %p89
      %s92 = sadd.s32 %s91, 1
      %p95 = scmp.eq.s32.totalorder %s17, 3
      %p96 = scmp.ne.s32.totalorder %s91, %s93
      %p97 = scmp.eq.s32.totalorder %s17, 0
      %p98 = por %p96, %p97
      %p99 = scmp.ne.s32.totalorder %s91, %s93
      %p100 = scmp.eq.s32.totalorder %s22, 3
      %p101 = por %p99, %p100
      %p102 = scmp.ne.s32.totalorder %s93, %s94
      %p103 = scmp.eq.s32.totalorder %s22, 0
      %p104 = por %p102, %p103
      %p105 = scmp.ne.s32.totalorder %s93, %s94
      %p106 = scmp.eq.s32.totalorder %s23, 3
      %p107 = por %p105, %p106
      %p109 = scmp.ne.s32.totalorder %s94, %s108
      %p110 = scmp.eq.s32.totalorder %s23, 0
      %p111 = por %p109, %p110
      %s113 = sadd.s32 %s112, 1
      %p116 = scmp.eq.s32.totalorder %s17, 3
      %p117 = scmp.ne.s32.totalorder %s112, %s114
      %p118 = scmp.eq.s32.totalorder %s17, 0
      %p119 = por %p117, %p118
      %p120 = scmp.ne.s32.totalorder %s112, %s114
      %p121 = scmp.eq.s32.totalorder %s22, 3
      %p122 = por %p120, %p121
      %p123 = scmp.ne.s32.totalorder %s114, %s115
      %p124 = scmp.eq.s32.totalorder %s22, 0
      %p125 = por %p123, %p124
      %p126 = scmp.ne.s32.totalorder %s114, %s115
      %p127 = scmp.eq.s32.totalorder %s23, 3
      %p128 = por %p126, %p127
      %p130 = scmp.ne.s32.totalorder %s115, %s129
      %p131 = scmp.eq.s32.totalorder %s23, 0
      %p132 = por %p130, %p131
      %s133 = ssub.s32 %s24, %s43
      %s134 = ssub.s32 %s25, %s39
      %s135 = sor.u32 %s133, %s134
      %p136 = scmp.eq.s32.totalorder %s135, 0
      %s138 = sadd.s32 %s137, 1
      %s139 = scalar_select %p136, %s137, %s138
      %p142 = pneg %p136
      %p143 = scmp.eq.s32.totalorder %s17, 3
      %p144 = por %p142, %p143
      %p145 = scmp.ne.s32.totalorder %s137, %s140
      %p146 = scmp.eq.s32.totalorder %s17, 0
      %p147 = por %p145, %p146
      %p148 = scmp.ne.s32.totalorder %s137, %s140
      %p149 = scmp.eq.s32.totalorder %s22, 3
      %p150 = por %p148, %p149
      %p151 = scmp.ne.s32.totalorder %s140, %s141
      %p152 = scmp.eq.s32.totalorder %s22, 0
      %p153 = por %p151, %p152
      %p154 = scmp.ne.s32.totalorder %s140, %s141
      %p155 = scmp.eq.s32.totalorder %s23, 3
      %p156 = por %p154, %p155
      %p158 = scmp.ne.s32.totalorder %s141, %s157
      %p159 = scmp.eq.s32.totalorder %s23, 0
      %p160 = por %p158, %p159
      %p161 = scmp.le.s32.totalorder 1, %s17
      %p162 = scmp.lt.s32.totalorder %s17, 5
      %p163 = pnand %p161, %p162
      %p164 = pneg %p163
      // Predicated region
      $region9: #{tpu_custom_call.1} parent=5 // pred_check
        _
      $region10: #{tpu_custom_call.1} parent=5 // pred_check_branch
        %166 = sbr.rel (%p163) target = $region12
      $region11: #{tpu_custom_call.1} parent=5 // pred_region
        %s167 = ssub.s32 %s17, 1
        // Predicated region
        $region13: #{tpu_custom_call.1} parent=11 // pred_check
          %p168 = pneg %p83
        $region14: #{tpu_custom_call.1} parent=11 // pred_check_branch
          %170 = sbr.rel (%p168) target = $region16
        $region15: #{tpu_custom_call.1} parent=11 // pred_region
          %172 = vsyncadd [#allocation10], 0
          %s173 = sshll.u32 %s1, 4
          %s174 = int_to_ptr.hbm [resolvable:$true] %s173
          %s175 = sshll.u32 [#allocation9], 4
          %s176 = int_to_ptr.vmem [resolvable:$true] %s175
          %181 = dma.hbm_to_vmem [thread:$0]  %s174, 512, %s176, [#allocation10], 64, 64, 4
        $region16: #{tpu_custom_call.1} parent=11 // pred_fallthru
          _
        // Predicated region
        $region17: #{tpu_custom_call.1} parent=11 // pred_check
          %p182 = pneg %p104
        $region18: #{tpu_custom_call.1} parent=11 // pred_check_branch
          %184 = sbr.rel (%p182) target = $region20
        $region19: #{tpu_custom_call.1} parent=11 // pred_region
          %186 = vsyncadd [#allocation10], 0
          %s187 = sshll.u32 %s2, 4
          %s188 = int_to_ptr.hbm [resolvable:$true] %s187
          %s189 = sshll.u32 [#allocation11], 4
          %s190 = int_to_ptr.vmem [resolvable:$true] %s189
          %195 = dma.hbm_to_vmem [thread:$0]  %s188, 256, %s190, [#allocation10], 64, 64, 4
        $region20: #{tpu_custom_call.1} parent=11 // pred_fallthru
          _
        // Predicated region
        $region21: #{tpu_custom_call.1} parent=11 // pred_check
          %p196 = pneg %p125
        $region22: #{tpu_custom_call.1} parent=11 // pred_check_branch
          %198 = sbr.rel (%p196) target = $region24
        $region23: #{tpu_custom_call.1} parent=11 // pred_region
          _
        $region24: #{tpu_custom_call.1} parent=11 // pred_fallthru
          _
      $region12: #{tpu_custom_call.1} parent=5 // pred_fallthru
        _
      %p199 = scmp.lt.s32.totalorder %s17, 4
      // Predicated region
      $region25: #{tpu_custom_call.1} parent=5 // pred_check
        %p200 = pneg %p199
      $region26: #{tpu_custom_call.1} parent=5 // pred_check_branch
        %202 = sbr.rel (%p200) target = $region28
      $region27: #{tpu_custom_call.1} parent=5 // pred_region
        // Predicated region
        $region29: #{tpu_custom_call.1} parent=27 // pred_check
          %p203 = pneg %p56
        $region30: #{tpu_custom_call.1} parent=27 // pred_check_branch
          %205 = sbr.rel (%p203) target = $region32
        $region31: #{tpu_custom_call.1} parent=27 // pred_region
          %s206 = sand.u32 %s46, 1
          %s207 = scalar_lea.sflag [#allocation7], %s206
          %s208 = sand.u32 %s46, 1
          %s209 = smul.addr %s208, 4
          %s210 = scalar_lea.vmem [#allocation6], %s209
          %212 = vsyncadd %s207, 0
          %s213 = smul.addr %s24, 4
          %s214 = scalar_lea.hbm %s0, %s213
          %s216 = sshll.u32 %s214, 4
          %s217 = int_to_ptr.hbm [resolvable:$true] %s216
          %s218 = sshll.u32 %s210, 4
          %s219 = int_to_ptr.vmem [resolvable:$true] %s218
          %221 = dma.hbm_to_vmem [thread:$0]  %s217, 64, %s219, %s207
        $region32: #{tpu_custom_call.1} parent=27 // pred_fallthru
          _
      $region28: #{tpu_custom_call.1} parent=5 // pred_fallthru
        _
      %p222 = scmp.le.s32.totalorder 1, %s17
      %p223 = scmp.lt.s32.totalorder %s17, 5
      %p224 = pnand %p222, %p223
      %p225 = pneg %p224
      // Predicated region
      $region33: #{tpu_custom_call.1} parent=5 // pred_check
        _
      $region34: #{tpu_custom_call.1} parent=5 // pred_check_branch
        %227 = sbr.rel (%p224) target = $region36
      $region35: #{tpu_custom_call.1} parent=5 // pred_region
        %s228 = ssub.s32 %s17, 1
        %s229 = sand.u32 %s49, 1
        %s230 = scalar_lea.sflag [#allocation7], %s229
        %s231 = sand.u32 %s49, 1
        %s232 = smul.addr %s231, 4
        %s233 = scalar_lea.vmem [#allocation6], %s232
        // Predicated region
        $region37: #{tpu_custom_call.1} parent=35 // pred_check
          %p234 = pneg %p62
        $region38: #{tpu_custom_call.1} parent=35 // pred_check_branch
          %236 = sbr.rel (%p234) target = $region40
        $region39: #{tpu_custom_call.1} parent=35 // pred_region
          %238 = dma.done %s230, 64
        $region40: #{tpu_custom_call.1} parent=35 // pred_fallthru
          _
        // Predicated region
        $region41: #{tpu_custom_call.1} parent=35 // pred_check
          %p239 = pneg %p83
        $region42: #{tpu_custom_call.1} parent=35 // pred_check_branch
          %241 = sbr.rel (%p239) target = $region44
        $region43: #{tpu_custom_call.1} parent=35 // pred_region
          %243 = dma.done [#allocation10], 512
        $region44: #{tpu_custom_call.1} parent=35 // pred_fallthru
          _
        // Predicated region
        $region45: #{tpu_custom_call.1} parent=35 // pred_check
          %p244 = pneg %p104
        $region46: #{tpu_custom_call.1} parent=35 // pred_check_branch
          %246 = sbr.rel (%p244) target = $region48
        $region47: #{tpu_custom_call.1} parent=35 // pred_region
          %248 = dma.done [#allocation10], 256
        $region48: #{tpu_custom_call.1} parent=35 // pred_fallthru
          _
        %s249 = sand.u32 %s49, 1
        %s250 = scalar_lea.sflag [#allocation7], %s249
        %s251 = sand.u32 %s49, 1
        %s252 = smul.addr %s251, 4
        %s253 = scalar_lea.vmem [#allocation6], %s252
        %p254 = pneg %p62
        %p255 = pneg %p59
        %p256 = pneg %p83
        %p257 = pneg %p80
        %p258 = pneg %p104
        %p259 = pneg %p101
        %p260 = pneg %p125
        %p261 = pneg %p122
        %p262 = pneg %p153
        %p263 = pneg %p150
        %s264 = sand.u32 %s140, 1
        %s265 = scalar_lea.sflag [#allocation8], %s264
        %s266 = sand.u32 %s140, 1
        %s267 = smul.addr %s266, 8
        %s268 = scalar_lea.vmem [#allocation12], %s267
        %p270 = scmp.eq.s32.totalorder %s29, 0
        // Predicated region
        $region49: #{tpu_custom_call.1} parent=35 // pred_check
          %p271 = pneg %p270
        $region50: #{tpu_custom_call.1} parent=35 // pred_check_branch
          %273 = sbr.rel (%p271) target = $region52
        $region51: #{tpu_custom_call.1} parent=35 // pred_region
          %vm274 = vcmask 261120
          %275 = vst.msk [vmem:[#allocation5] sm:$0xff] %vm274, 0.0
        $region52: #{tpu_custom_call.1} parent=35 // pred_fallthru
          _
        %p276 = scmp.eq.s32.totalorder %s28, 0
        // Predicated region
        $region53: #{tpu_custom_call.1} parent=35 // pred_check
          %p277 = pneg %p276
        $region54: #{tpu_custom_call.1} parent=35 // pred_check_branch
          %279 = sbr.rel (%p277) target = $region56
        $region55: #{tpu_custom_call.1} parent=35 // pred_region
          %v280 = vld [vmem:[%s233] sm:$0xf]
          %s281 = smul.u32 %s29, 4
          %s282 = smul.addr %s281, 4
          %s283 = scalar_lea.vmem [#allocation9], %s282
          %v284 = vld [vmem:[%s283] sm:$0xf]
          %v285 = vld [vmem:[%s283 + $0x4] sm:$0xf]
          %v286 = vld [vmem:[%s283 + $0x8] sm:$0xf]
          %v287 = vld [vmem:[%s283 + $0xc] sm:$0xf]
          %v292 = vunpack.c.l.b16 %v284
          %v293 = vunpack.c.l.b16 %v285
          %v294 = vunpack.c.l.b16 %v286
          %v295 = vunpack.c.l.b16 %v287
          %v296 = vpack.c.b16 %v293, %v292
          %v297 = vpack.c.b16 %v295, %v294
          %298 = vrot.lane.b32.xlu0 %v296, 112
          %v299 = vpop.permute.xlu0 %298
          %300 = vrot.lane.b32.xlu0 %v297, 112
          %v301 = vpop.permute.xlu0 %300
          %vm304 = vcmask 261120
          %v306 = vsel %vm304, %v280, 0
          %308 = vmatpush.bf16.msra.mxu0 0
          %309 = vmatpush.bf16.msra.mxu0 0
          %310 = vmatpush.bf16.msra.mxu0 0
          %311 = vmatpush.bf16.msra.mxu0 0
          %312 = vmatpush.bf16.msra.mxu0 0
          %313 = vmatpush.bf16.msra.mxu0 0
          %314 = vmatpush.bf16.msra.mxu0 %v301
          %315 = vmatpush.bf16.msra.mxu0 %v299
          %316 = vmatmul.bf16.gmra.mxu0 %v306
          %v317 = vpop.f32.mrf.mxu0
          %v318 = vadd.f32 0.0, %v317
          %v319 = vpop.f32.mrf.mxu0
          %320 = vdwg.mxu0
          %v321 = vpack.c.bf16 %v318, %v318
          %s322 = smul.addr %s29, 4
          %s323 = scalar_lea.vmem [#allocation2], %s322
          %vm324 = vcmask 125952
          %325 = vst.msk [vmem:[%s323] sm:$0xf] %vm324, %v321
          %326 = vrot.lane.b32.xlu0 %v296, 96
          %v327 = vpop.permute.xlu0 %326
          %328 = vrot.lane.b32.xlu0 %v297, 96
          %v329 = vpop.permute.xlu0 %328
          %332 = vmatpush.bf16.msra.mxu0 0
          %333 = vmatpush.bf16.msra.mxu0 0
          %334 = vmatpush.bf16.msra.mxu0 0
          %335 = vmatpush.bf16.msra.mxu0 0
          %336 = vmatpush.bf16.msra.mxu0 0
          %337 = vmatpush.bf16.msra.mxu0 0
          %338 = vmatpush.bf16.msra.mxu0 %v329
          %339 = vmatpush.bf16.msra.mxu0 %v327
          %340 = vmatmul.bf16.gmra.mxu0 %v306
          %v341 = vpop.f32.mrf.mxu0
          %v342 = vadd.f32 0.0, %v341
          %v343 = vpop.f32.mrf.mxu0
          %344 = vdwg.mxu0
          %v345 = vpack.c.bf16 %v342, %v342
          %s346 = smul.addr %s29, 4
          %s347 = scalar_lea.vmem [#allocation3], %s346
          %348 = vst.msk [vmem:[%s347] sm:$0xf] %vm324, %v345
        $region56: #{tpu_custom_call.1} parent=35 // pred_fallthru
          _
        %s349 = smul.u32 %s28, 8
        %s350 = sshra.s32 %s349, 3
        %s351 = sand.u32 %s349, 7
        %s352 = smul.addr %s350, 4
        %s353 = scalar_lea.vmem %s233, %s352 [#allocation6]
        %v354 = vld [vmem:[%s353] sm:$0xf]
        %s355 = smul.u32 %s29, 4
        %s356 = smul.addr %s355, 4
        %s357 = scalar_lea.vmem [#allocation9], %s356
        %v358 = vld [vmem:[%s357] sm:$0xf]
        %v359 = vld [vmem:[%s357 + $0x4] sm:$0xf]
        %v360 = vld [vmem:[%s357 + $0x8] sm:$0xf]
        %v361 = vld [vmem:[%s357 + $0xc] sm:$0xf]
        %v366 = vunpack.c.l.b16 %v358
        %v367 = vunpack.c.l.b16 %v359
        %v368 = vunpack.c.l.b16 %v360
        %v369 = vunpack.c.l.b16 %v361
        %v370 = vpack.c.b16 %v367, %v366
        %v371 = vpack.c.b16 %v369, %v368
        %vm374 = vcmask 261120
        %v376 = vsel %vm374, %v354, 0
        %378 = vmatpush.bf16.msra.mxu0 0
        %379 = vmatpush.bf16.msra.mxu0 0
        %380 = vmatpush.bf16.msra.mxu0 0
        %381 = vmatpush.bf16.msra.mxu0 0
        %382 = vmatpush.bf16.msra.mxu0 0
        %383 = vmatpush.bf16.msra.mxu0 0
        %384 = vmatpush.bf16.msra.mxu0 %v371
        %385 = vmatpush.bf16.msra.mxu0 %v370
        %386 = vmatmul.bf16.gmra.mxu0 %v376
        %v387 = vpop.f32.mrf.mxu0
        %v388 = vadd.f32 0.0, %v387
        %v389 = vpop.f32.mrf.mxu0
        %390 = vdwg.mxu0
        %v391 = vpack.c.bf16 %v388, %v388
        %s392 = smul.addr %s29, 4
        %s393 = scalar_lea.vmem [#allocation2], %s392
        %v394 = vld [vmem:[%s393] sm:$0xf]
        %s395 = smul.addr %s29, 4
        %s396 = scalar_lea.vmem [#allocation3], %s395
        %v397 = vld [vmem:[%s396] sm:$0xf]
        %vm398 = vcmask 31744
        %v400 = vsel %vm398, %v391, 0
        %v403 = vsel %vm398, %v394, 0
        %405 = vmatpush.bf16.xpose.msra.mxu0 0
        %406 = vmatpush.bf16.xpose.msra.mxu0 0
        %407 = vmatpush.bf16.xpose.msra.mxu0 0
        %408 = vmatpush.bf16.xpose.msra.mxu0 0
        %409 = vmatpush.bf16.xpose.msra.mxu0 0
        %410 = vmatpush.bf16.xpose.msra.mxu0 0
        %411 = vmatpush.bf16.xpose.msra.mxu0 0
        %412 = vmatpush.bf16.xpose.msra.mxu0 %v403
        %413 = vmatmul.bf16.gmra.mxu0 %v400
        %v414 = vpop.f32.mrf.mxu0
        %v415 = vadd.f32 0.0, %v414
        %v416 = vpop.f32.mrf.mxu0
        %417 = vdwg.mxu0
        %vm418 = vcmask 64512
        %v419 = vsel %vm418, %v415, -inf
        %420 = vmax.xlane.f32.xlu0 %v419
        %v421 = vpop.xlane.xlu0 %420
        %v422 = vsub.f32 %v415, %v421
        %v423 = vmul.f32 %v422, 1.442695
        %v424 = vpow.pop %v423
        %v425 = vsel %vm418, %v424, 0.0
        %426 = vadd.xlane.f32.xlu0 %v425
        %v427 = vpop.xlane.xlu0 %426
        %v428 = vpack.c.bf16 %v424, %v424
        %v430 = vsel %vm418, %v428, 0
        %vm432 = vcmask 1043456
        %v434 = vsel %vm432, %v397, 0
        %436 = vmatpush.bf16.msra.mxu0 0
        %437 = vmatpush.bf16.msra.mxu0 0
        %438 = vmatpush.bf16.msra.mxu0 0
        %439 = vmatpush.bf16.msra.mxu0 0
        %440 = vmatpush.bf16.msra.mxu0 0
        %441 = vmatpush.bf16.msra.mxu0 0
        %442 = vmatpush.bf16.msra.mxu0 0
        %443 = vmatpush.bf16.msra.mxu0 %v434
        %444 = vmatmul.bf16.gmra.mxu0 %v430
        %v445 = vpop.f32.mrf.mxu0
        %v446 = vadd.f32 0.0, %v445
        %v447 = vpop.f32.mrf.mxu0
        %448 = vdwg.mxu0
        %v449 = vrcp.pop %v427
        %v450 = vmul.f32 %v446, %v449
        %v451 = vpack.c.bf16 %v450, %v450
        %vm452 = vcmask 27648
        %453 = vst.msk [vmem:[#allocation4] sm:$0xf] %vm452, %v451
        %v454 = vld [vmem:[%s393] sm:$0xf]
        %v455 = vld [vmem:[%s396] sm:$0xf]
        %v457 = vunpack.c.l.b16 %v391
        %v458 = vpack.c.b16 %v457, %v457
        %459 = vrot.lane.b32.xlu0 %v458, 124
        %v460 = vpop.permute.xlu0 %459
        %v462 = vunpack.c.l.b16 %v454
        %v463 = vpack.c.b16 %v462, %v462
        %464 = vrot.lane.b32.xlu0 %v463, 124
        %v465 = vpop.permute.xlu0 %464
        %v467 = vsel %vm398, %v460, 0
        %v470 = vsel %vm398, %v465, 0
        %472 = vmatpush.bf16.xpose.msra.mxu0 0
        %473 = vmatpush.bf16.xpose.msra.mxu0 0
        %474 = vmatpush.bf16.xpose.msra.mxu0 0
        %475 = vmatpush.bf16.xpose.msra.mxu0 0
        %476 = vmatpush.bf16.xpose.msra.mxu0 0
        %477 = vmatpush.bf16.xpose.msra.mxu0 0
        %478 = vmatpush.bf16.xpose.msra.mxu0 0
        %479 = vmatpush.bf16.xpose.msra.mxu0 %v470
        %480 = vmatmul.bf16.gmra.mxu0 %v467
        %v481 = vpop.f32.mrf.mxu0
        %v482 = vadd.f32 0.0, %v481
        %v483 = vpop.f32.mrf.mxu0
        %484 = vdwg.mxu0
        %v485 = vsel %vm418, %v482, -inf
        %486 = vmax.xlane.f32.xlu0 %v485
        %v487 = vpop.xlane.xlu0 %486
        %v488 = vsub.f32 %v482, %v487
        %v489 = vmul.f32 %v488, 1.442695
        %v490 = vpow.pop %v489
        %v491 = vsel %vm418, %v490, 0.0
        %492 = vadd.xlane.f32.xlu0 %v491
        %v493 = vpop.xlane.xlu0 %492
        %v494 = vpack.c.bf16 %v490, %v490
        %v496 = vunpack.c.l.b16 %v455
        %v497 = vpack.c.b16 %v496, %v496
        %498 = vrot.lane.b32.xlu0 %v497, 124
        %v499 = vpop.permute.xlu0 %498
        %v501 = vsel %vm418, %v494, 0
        %v504 = vsel %vm432, %v499, 0
        %506 = vmatpush.bf16.msra.mxu0 0
        %507 = vmatpush.bf16.msra.mxu0 0
        %508 = vmatpush.bf16.msra.mxu0 0
        %509 = vmatpush.bf16.msra.mxu0 0
        %510 = vmatpush.bf16.msra.mxu0 0
        %511 = vmatpush.bf16.msra.mxu0 0
        %512 = vmatpush.bf16.msra.mxu0 0
        %513 = vmatpush.bf16.msra.mxu0 %v504
        %514 = vmatmul.bf16.gmra.mxu0 %v501
        %v515 = vpop.f32.mrf.mxu0
        %v516 = vadd.f32 0.0, %v515
        %v517 = vpop.f32.mrf.mxu0
        %518 = vdwg.mxu0
        %v519 = vrcp.pop %v493
        %v520 = vmul.f32 %v516, %v519
        %v521 = vpack.c.bf16 %v520, %v520
        %523 = vrot.lane.b32.xlu0 %v521, 4
        %v524 = vpop.permute.xlu0 %523
        %vm526 = vcmask 60448
        %527 = vst.msk [vmem:[#allocation4] sm:$0xf] %vm526, %v524
        %v528 = vld [vmem:[%s393] sm:$0xf]
        %v529 = vld [vmem:[%s396] sm:$0xf]
        %530 = vrot.lane.b32.xlu0 %v458, 120
        %v531 = vpop.permute.xlu0 %530
        %v533 = vunpack.c.l.b16 %v528
        %v534 = vpack.c.b16 %v533, %v533
        %535 = vrot.lane.b32.xlu0 %v534, 120
        %v536 = vpop.permute.xlu0 %535
        %v538 = vsel %vm398, %v531, 0
        %v541 = vsel %vm398, %v536, 0
        %543 = vmatpush.bf16.xpose.msra.mxu0 0
        %544 = vmatpush.bf16.xpose.msra.mxu0 0
        %545 = vmatpush.bf16.xpose.msra.mxu0 0
        %546 = vmatpush.bf16.xpose.msra.mxu0 0
        %547 = vmatpush.bf16.xpose.msra.mxu0 0
        %548 = vmatpush.bf16.xpose.msra.mxu0 0
        %549 = vmatpush.bf16.xpose.msra.mxu0 0
        %550 = vmatpush.bf16.xpose.msra.mxu0 %v541
        %551 = vmatmul.bf16.gmra.mxu0 %v538
        %v552 = vpop.f32.mrf.mxu0
        %v553 = vadd.f32 0.0, %v552
        %v554 = vpop.f32.mrf.mxu0
        %555 = vdwg.mxu0
        %v556 = vsel %vm418, %v553, -inf
        %557 = vmax.xlane.f32.xlu0 %v556
        %v558 = vpop.xlane.xlu0 %557
        %v559 = vsub.f32 %v553, %v558
        %v560 = vmul.f32 %v559, 1.442695
        %v561 = vpow.pop %v560
        %v562 = vsel %vm418, %v561, 0.0
        %563 = vadd.xlane.f32.xlu0 %v562
        %v564 = vpop.xlane.xlu0 %563
        %v565 = vpack.c.bf16 %v561, %v561
        %v567 = vunpack.c.l.b16 %v529
        %v568 = vpack.c.b16 %v567, %v567
        %569 = vrot.lane.b32.xlu0 %v568, 120
        %v570 = vpop.permute.xlu0 %569
        %v572 = vsel %vm418, %v565, 0
        %v575 = vsel %vm432, %v570, 0
        %577 = vmatpush.bf16.msra.mxu0 0
        %578 = vmatpush.bf16.msra.mxu0 0
        %579 = vmatpush.bf16.msra.mxu0 0
        %580 = vmatpush.bf16.msra.mxu0 0
        %581 = vmatpush.bf16.msra.mxu0 0
        %582 = vmatpush.bf16.msra.mxu0 0
        %583 = vmatpush.bf16.msra.mxu0 0
        %584 = vmatpush.bf16.msra.mxu0 %v575
        %585 = vmatmul.bf16.gmra.mxu0 %v572
        %v586 = vpop.f32.mrf.mxu0
        %v587 = vadd.f32 0.0, %v586
        %v588 = vpop.f32.mrf.mxu0
        %589 = vdwg.mxu0
        %v590 = vrcp.pop %v564
        %v591 = vmul.f32 %v587, %v590
        %v592 = vpack.c.bf16 %v591, %v591
        %594 = vrot.lane.b32.xlu0 %v592, 8
        %v595 = vpop.permute.xlu0 %594
        %vm597 = vcmask 93248
        %598 = vst.msk [vmem:[#allocation4] sm:$0xf] %vm597, %v595
        %v599 = vld [vmem:[%s393] sm:$0xf]
        %v600 = vld [vmem:[%s396] sm:$0xf]
        %601 = vrot.lane.b32.xlu0 %v458, 116
        %v602 = vpop.permute.xlu0 %601
        %v604 = vunpack.c.l.b16 %v599
        %v605 = vpack.c.b16 %v604, %v604
        %606 = vrot.lane.b32.xlu0 %v605, 116
        %v607 = vpop.permute.xlu0 %606
        %v609 = vsel %vm398, %v602, 0
        %v612 = vsel %vm398, %v607, 0
        %614 = vmatpush.bf16.xpose.msra.mxu0 0
        %615 = vmatpush.bf16.xpose.msra.mxu0 0
        %616 = vmatpush.bf16.xpose.msra.mxu0 0
        %617 = vmatpush.bf16.xpose.msra.mxu0 0
        %618 = vmatpush.bf16.xpose.msra.mxu0 0
        %619 = vmatpush.bf16.xpose.msra.mxu0 0
        %620 = vmatpush.bf16.xpose.msra.mxu0 0
        %621 = vmatpush.bf16.xpose.msra.mxu0 %v612
        %622 = vmatmul.bf16.gmra.mxu0 %v609
        %v623 = vpop.f32.mrf.mxu0
        %v624 = vadd.f32 0.0, %v623
        %v625 = vpop.f32.mrf.mxu0
        %626 = vdwg.mxu0
        %v627 = vsel %vm418, %v624, -inf
        %628 = vmax.xlane.f32.xlu0 %v627
        %v629 = vpop.xlane.xlu0 %628
        %v630 = vsub.f32 %v624, %v629
        %v631 = vmul.f32 %v630, 1.442695
        %v632 = vpow.pop %v631
        %v633 = vsel %vm418, %v632, 0.0
        %634 = vadd.xlane.f32.xlu0 %v633
        %v635 = vpop.xlane.xlu0 %634
        %v636 = vpack.c.bf16 %v632, %v632
        %v638 = vunpack.c.l.b16 %v600
        %v639 = vpack.c.b16 %v638, %v638
        %640 = vrot.lane.b32.xlu0 %v639, 116
        %v641 = vpop.permute.xlu0 %640
        %v643 = vsel %vm418, %v636, 0
        %v646 = vsel %vm432, %v641, 0
        %648 = vmatpush.bf16.msra.mxu0 0
        %649 = vmatpush.bf16.msra.mxu0 0
        %650 = vmatpush.bf16.msra.mxu0 0
        %651 = vmatpush.bf16.msra.mxu0 0
        %652 = vmatpush.bf16.msra.mxu0 0
        %653 = vmatpush.bf16.msra.mxu0 0
        %654 = vmatpush.bf16.msra.mxu0 0
        %655 = vmatpush.bf16.msra.mxu0 %v646
        %656 = vmatmul.bf16.gmra.mxu0 %v643
        %v657 = vpop.f32.mrf.mxu0
        %v658 = vadd.f32 0.0, %v657
        %v659 = vpop.f32.mrf.mxu0
        %660 = vdwg.mxu0
        %v661 = vrcp.pop %v635
        %v662 = vmul.f32 %v658, %v661
        %v663 = vpack.c.bf16 %v662, %v662
        %665 = vrot.lane.b32.xlu0 %v663, 12
        %v666 = vpop.permute.xlu0 %665
        %vm668 = vcmask 126048
        %669 = vst.msk [vmem:[#allocation4] sm:$0xf] %vm668, %v666
        %v670 = vld [vmem:[#allocation5] sm:$0xff]
        %v671 = vld [vmem:[#allocation4] sm:$0xf]
        %s672 = smul.u32 %s29, 2
        %s673 = smul.addr %s672, 4
        %s674 = scalar_lea.vmem [#allocation11], %s673
        %v675 = vld [vmem:[%s674] sm:$0xf]
        %v676 = vld [vmem:[%s674 + $0x4] sm:$0xf]
        %v679 = vunpack.c.l.b16 %v675
        %v680 = vunpack.c.l.b16 %v676
        %v681 = vpack.c.b16 %v680, %v679
        %vm683 = vcmask 130048
        %v685 = vsel %vm683, %v671, 0
        %687 = vmatpush.bf16.msra.mxu0 0
        %688 = vmatpush.bf16.msra.mxu0 0
        %689 = vmatpush.bf16.msra.mxu0 0
        %690 = vmatpush.bf16.msra.mxu0 0
        %691 = vmatpush.bf16.msra.mxu0 0
        %692 = vmatpush.bf16.msra.mxu0 0
        %693 = vmatpush.bf16.msra.mxu0 0
        %694 = vmatpush.bf16.msra.mxu0 %v681
        %695 = vmatmul.bf16.gmra.mxu0 %v685
        %v696 = vpop.f32.mrf.mxu0
        %v697 = vadd.f32 0.0, %v696
        %v698 = vpop.f32.mrf.mxu0
        %699 = vdwg.mxu0
        %v700 = vadd.f32 %v670, %v697
        %701 = vst.msk [vmem:[#allocation5] sm:$0xff] %vm374, %v700
        %p702 = scmp.eq.s32.totalorder %s29, 1
        // Predicated region
        $region57: #{tpu_custom_call.1} parent=35 // pred_check
          %p703 = pneg %p702
        $region58: #{tpu_custom_call.1} parent=35 // pred_check_branch
          %705 = sbr.rel (%p703) target = $region60
        $region59: #{tpu_custom_call.1} parent=35 // pred_region
          %v706 = vld [vmem:[#allocation5] sm:$0xff]
          %v707 = vld [vmem:[%s3] sm:$0x1]
          %v709 = vperm.slane %v707, 0
          %v711 = vadd.f32 %v706, %v709
          %712 = vst.msk [vmem:[%s268] sm:$0xff] %vm374, %v711
        $region60: #{tpu_custom_call.1} parent=35 // pred_fallthru
          _
        %s713 = sand.u32 %s140, 1
        %s714 = scalar_lea.sflag [#allocation8], %s713
        %s715 = sand.u32 %s140, 1
        %s716 = smul.addr %s715, 8
        %s717 = scalar_lea.vmem [#allocation12], %s716
        // Predicated region
        $region61: #{tpu_custom_call.1} parent=35 // pred_check
          %p718 = pneg %p150
        $region62: #{tpu_custom_call.1} parent=35 // pred_check_branch
          %720 = sbr.rel (%p718) target = $region64
        $region63: #{tpu_custom_call.1} parent=35 // pred_region
          %722 = vsyncadd %s714, 0
          %s723 = sadd.s32 %s28, %s27
          %s724 = smul.addr %s723, 8
          %s725 = scalar_lea.hbm %s4, %s724
          %s727 = sshll.u32 %s717, 4
          %s728 = int_to_ptr.vmem [resolvable:$true] %s727
          %s729 = sshll.u32 %s725, 4
          %s730 = int_to_ptr.hbm [resolvable:$true] %s729
          %732 = dma.vmem_to_hbm [thread:$0]  %s728, 128, %s730, %s714
        $region64: #{tpu_custom_call.1} parent=35 // pred_fallthru
          _
      $region36: #{tpu_custom_call.1} parent=5 // pred_fallthru
        _
      %p733 = scmp.le.s32.totalorder 2, %s17
      // Predicated region
      $region65: #{tpu_custom_call.1} parent=5 // pred_check
        %p734 = pneg %p733
      $region66: #{tpu_custom_call.1} parent=5 // pred_check_branch
        %736 = sbr.rel (%p734) target = $region68
      $region67: #{tpu_custom_call.1} parent=5 // pred_region
        %s737 = ssub.s32 %s17, 2
        // Predicated region
        $region69: #{tpu_custom_call.1} parent=67 // pred_check
          %p738 = pneg %p156
        $region70: #{tpu_custom_call.1} parent=67 // pred_check_branch
          %740 = sbr.rel (%p738) target = $region72
        $region71: #{tpu_custom_call.1} parent=67 // pred_region
          %s741 = sand.u32 %s141, 1
          %s742 = scalar_lea.sflag [#allocation8], %s741
          %s743 = sand.u32 %s141, 1
          %s744 = smul.addr %s743, 8
          %s745 = scalar_lea.vmem [#allocation12], %s744
          %747 = dma.done %s742, 128
        $region72: #{tpu_custom_call.1} parent=67 // pred_fallthru
          _
      $region68: #{tpu_custom_call.1} parent=5 // pred_fallthru
        _
    $region6: #{tpu_custom_call.1} parent=1 // loop_footer
      %s21 = sadd.s32 1, %s17
    $region7: #{tpu_custom_call.1} parent=1 // loop_footer_branch
      %16 = sbr.rel target = $region3
    $region8: #{tpu_custom_call.1} parent=1 // loop_exit
      _
    %748 = vsyncpa [#allocation7], 1
    %s749 = scalar_lea.sflag [#allocation7], 1
    %750 = vsyncpa %s749, 1
    %751 = vsyncpa [#allocation10], 1
    %752 = vsyncpa [#allocation8], 1
    %s753 = scalar_lea.sflag [#allocation8], 1
    %754 = vsyncpa %s753, 1

</llo_original>
